<compile_context>
chip_gen: v5e
topology: v5e:2x2
jax: 0.10.0
libtpu: 0.0.40
codegen_flags: <defaults>
</compile_context>

<pallas_src>
import numpy as np
import jax
import jax.numpy as jnp
from jax.experimental import pallas as pl
from jax.experimental.pallas import tpu as pltpu


def _round_up(x: int, m: int) -> int:
    return ((x + m - 1) // m) * m


def _make_kernel(threshold: float, mask_type: str):
    """Kernel body statically specialized on mask_type."""
    if mask_type not in ("intra", "inter", "both"):
        raise ValueError(f"unknown mask_type: {mask_type}")

    def kernel(efc_ref, out_ref):
        efc = efc_ref[...]                      # (1, Rp, Cp) f32, one vreg slab
        keep = efc >= threshold                 # torch.where(eFC >= thr, eFC, 0)

        if mask_type != "both":
            # Regenerate the hemispheric masks from index parity instead of
            # DMA-ing two constant f32 matrices from HBM.
            row = jax.lax.broadcasted_iota(jnp.int32, efc.shape, 1)
            col = jax.lax.broadcasted_iota(jnp.int32, efc.shape, 2)
            same_parity = ((row ^ col) & 1) == 0    # intra-hemisphere pairs
            if mask_type == "intra":
                keep = jnp.logical_and(keep, same_parity)
            else:  # "inter"
                keep = jnp.logical_and(keep, jnp.logical_not(same_parity))
        # mask_type == "both": intra_mask + inter_mask == all-ones, so the
        # masking is a no-op and the output is plain thresholding.

        out_ref[...] = jnp.where(keep, efc, jnp.zeros_like(efc))

    return kernel


def hemispherical_asymmetry_embedding(
    efc: jax.Array,
    num_regions: int,
    threshold: float,
    mask_type: str = "both",
) -> jax.Array:
    """Forward pass. Accepts (R, R) or batched (B, R, R) eFC matrices."""
    squeeze_batch = efc.ndim == 2
    if squeeze_batch:
        efc = efc[None]
    B = efc.shape[0]
    assert efc.shape[1:] == (num_regions, num_regions)

    # Pad to a sublane/lane-dense tile: rows -> multiple of 8, cols -> 128.
    rp = _round_up(num_regions, 8)
    cp = _round_up(num_regions, 128)
    efc_p = jnp.pad(
        efc, ((0, 0), (0, rp - num_regions), (0, cp - num_regions))
    )

    kernel = _make_kernel(float(threshold), mask_type)
    spec = pl.BlockSpec((1, rp, cp), lambda b: (b, 0, 0))

    out_p = pl.pallas_call(
        kernel,
        out_shape=jax.ShapeDtypeStruct((B, rp, cp), efc.dtype),
        grid=(B,),
        in_specs=[spec],
        out_specs=spec,
        compiler_params=pltpu.CompilerParams(
            dimension_semantics=("parallel",)
        ),
    )(efc_p)

    out = out_p[:, :num_regions, :num_regions]
    if squeeze_batch:
        out = out[0]
    return out


def _reference(efc, num_regions, threshold, mask_type="both"):
    """NumPy reference mirroring the PyTorch forward (explicit masks)."""
    left = np.arange(0, num_regions, 2)
    right = np.arange(1, num_regions, 2)
    intra = np.zeros((num_regions, num_regions), np.float32)
    intra[np.ix_(left, left)] = 1.0
    intra[np.ix_(right, right)] = 1.0
    inter = np.zeros((num_regions, num_regions), np.float32)
    inter[np.ix_(left, right)] = 1.0
    inter[np.ix_(right, left)] = 1.0

    e = np.asarray(efc, dtype=np.float32)
    th = np.where(e >= threshold, e, 0.0).astype(np.float32)
    if mask_type == "intra":
        return th * intra
    if mask_type == "inter":
        return th * inter
    return th * intra + th * inter


if __name__ == "__main__":
    num_regions = 116
    threshold = 0.7

    key = jax.random.PRNGKey(0)
    # equivalent of torch.rand((num_regions, num_regions)): uniform [0, 1)
    eFC = jax.random.uniform(key, (num_regions, num_regions), dtype=jnp.float32)

    # Unbatched, all three mask types.
    for mt in ("both", "intra", "inter"):
        out = hemispherical_asymmetry_embedding(eFC, num_regions, threshold, mt)
        out = jax.block_until_ready(out)
        ref = _reference(eFC, num_regions, threshold, mt)
        np.testing.assert_allclose(np.asarray(out), ref, rtol=1e-6, atol=1e-6)

    # Batched path (B=2) exercising the parallel grid axis.
    eFC_b = jax.random.uniform(
        jax.random.PRNGKey(1), (2, num_regions, num_regions), dtype=jnp.float32
    )
    out_b = hemispherical_asymmetry_embedding(eFC_b, num_regions, threshold, "both")
    out_b = jax.block_until_ready(out_b)
    ref_b = np.stack(
        [_reference(eFC_b[i], num_regions, threshold, "both") for i in range(2)]
    )
    np.testing.assert_allclose(np.asarray(out_b), ref_b, rtol=1e-6, atol=1e-6)

    print("KERNEL_OK")
</pallas_src>

<mosaic_0001>
module attributes {stable_mosaic.version = 11 : i64} {
  func.func @kernel(%arg0: i32, %arg1: memref<1x120x128xf32, #tpu.memory_space<vmem>>, %arg2: memref<1x120x128xf32, #tpu.memory_space<vmem>>) attributes {dimension_semantics = [#tpu.dimension_semantics<parallel>], iteration_bounds = array<i64: 1>, scalar_prefetch = 0 : i64, scratch_operands = 0 : i64, tpu.core_type = #tpu.core_type<tc>, window_params = [{transform_indices = @transform_0, window_bounds = array<i64: 1, 120, 128>}, {transform_indices = @transform_1, window_bounds = array<i64: 1, 120, 128>}]} {
    %c0 = arith.constant 0 : index
    %c0_0 = arith.constant 0 : index
    %c0_1 = arith.constant 0 : index
    %0 = vector.load %arg1[%c0, %c0_0, %c0_1] : memref<1x120x128xf32, #tpu.memory_space<vmem>>, vector<1x120x128xf32>
    %cst = arith.constant 0.699999988 : f32
    %1 = vector.broadcast %cst : f32 to vector<1x120x128xf32>
    %2 = arith.cmpf oge, %0, %1 : vector<1x120x128xf32>
    %cst_2 = arith.constant 0.000000e+00 : f32
    %3 = vector.broadcast %cst_2 : f32 to vector<1x120x128xf32>
    %4 = arith.select %2, %0, %3 : vector<1x120x128xi1>, vector<1x120x128xf32>
    %c0_3 = arith.constant 0 : index
    %c0_4 = arith.constant 0 : index
    %c0_5 = arith.constant 0 : index
    %5 = vector.load %arg2[%c0_3, %c0_4, %c0_5] : memref<1x120x128xf32, #tpu.memory_space<vmem>>, vector<1x120x128xf32>
    tpu.vector_store %arg2[%c0_3, %c0_4, %c0_5], %4 {strides = array<i32>} : memref<1x120x128xf32, #tpu.memory_space<vmem>>, vector<1x120x128xf32>,
    return
  }
  func.func @transform_0(%arg0: i32) -> (i32, i32, i32) {
    %c0_i32 = arith.constant 0 : i32
    %c0_i32_0 = arith.constant 0 : i32
    %c0_i32_1 = arith.constant 0 : i32
    return %arg0, %c0_i32, %c0_i32_0 : i32, i32, i32
  }
  func.func @transform_1(%arg0: i32) -> (i32, i32, i32) {
    %c0_i32 = arith.constant 0 : i32
    %c0_i32_0 = arith.constant 0 : i32
    %c0_i32_1 = arith.constant 0 : i32
    return %arg0, %c0_i32, %c0_i32_0 : i32, i32, i32
  }
}

</mosaic_0001>

<llo_original>
// kernel: tpu_custom_call.1
$region0: #{tpu_custom_call.1}
  #allocation0 [shape = 'u32[]', space=smem, size = 0x4, offset = 0x4, fixed_abs, tag = 'smem constant byte address 0x4 - core index']
  #allocation1 [shape = 'u32[72,128]{1,0:T(1,128)}', space=vmem, size = 0x9000, scoped, tag = 'internal scratch']
  %s0 = inlined_call_operand.hbm [shape: f32[1,120,128], index: 0, kind: input, shape index: {}]
  %s1 = inlined_call_operand.hbm [shape: f32[1,120,128], index: 1, kind: output, shape index: {}]
  %s2 = sld [smem:[#allocation0]]
  $region18: #{tpu_custom_call.1} parent=0
    _
  %s4 = ssub.s32 1, %s2
  %s5 = scalar_select 0, %s4, %s2
  $region1: #{tpu_custom_call.1} parent=0
    #allocation2 [shape = 'u8[61440]{0}', space=vmem, size = 0xf000, scoped, tag = 'input window, operand 0, single buffered']
    #allocation3 [shape = 's32[1]{0}', space=sflag, size = 0x4, scoped, tag = 'scoped memory for tpu_custom_call.1']
    #allocation4 [shape = 's32[1]{0}', space=sflag, size = 0x4, scoped, tag = 'scoped memory for tpu_custom_call.1']
    #allocation5 [shape = 'u8[61440]{0}', space=vmem, size = 0xf000, scoped, tag = 'output window, operand 0, single buffered']
    %6 = vsyncpa [#allocation3], 0
    %7 = vsyncpa [#allocation4], 0
    // Predicated region
    $region2: #{tpu_custom_call.1} parent=1 // pred_check
      _
    $region3: #{tpu_custom_call.1} parent=1 // pred_check_branch
      %9 = sbr.rel (0) target = $region5
    $region4: #{tpu_custom_call.1} parent=1 // pred_region
      %11 = vsyncadd [#allocation3], 0
      %s12 = sshll.u32 %s0, 4
      %s13 = int_to_ptr.hbm [resolvable:$true] %s12
      %s14 = sshll.u32 [#allocation2], 4
      %s15 = int_to_ptr.vmem [resolvable:$true] %s14
      %20 = dma.hbm_to_vmem [thread:$0]  %s13, 1920, %s15, [#allocation3], 128, 128, 8
    $region5: #{tpu_custom_call.1} parent=1 // pred_fallthru
      _
    // Predicated region
    $region6: #{tpu_custom_call.1} parent=1 // pred_check
      _
    $region7: #{tpu_custom_call.1} parent=1 // pred_check_branch
      %22 = sbr.rel (0) target = $region9
    $region8: #{tpu_custom_call.1} parent=1 // pred_region
      %24 = dma.done [#allocation3], 1920
    $region9: #{tpu_custom_call.1} parent=1 // pred_fallthru
      _
    %v25 = vld [vmem:[#allocation2] sm:$0xff]
    %v26 = vld [vmem:[#allocation2 + $0x8] sm:$0xff]
    %v27 = vld [vmem:[#allocation2 + $0x10] sm:$0xff]
    %v28 = vld [vmem:[#allocation2 + $0x18] sm:$0xff]
    %v29 = vld [vmem:[#allocation2 + $0x20] sm:$0xff]
    %v30 = vld [vmem:[#allocation2 + $0x28] sm:$0xff]
    %v31 = vld [vmem:[#allocation2 + $0x30] sm:$0xff]
    %v32 = vld [vmem:[#allocation2 + $0x38] sm:$0xff]
    %v33 = vld [vmem:[#allocation2 + $0x40] sm:$0xff]
    %v34 = vld [vmem:[#allocation2 + $0x48] sm:$0xff]
    %v35 = vld [vmem:[#allocation2 + $0x50] sm:$0xff]
    %v36 = vld [vmem:[#allocation2 + $0x58] sm:$0xff]
    %v37 = vld [vmem:[#allocation2 + $0x60] sm:$0xff]
    %v38 = vld [vmem:[#allocation2 + $0x68] sm:$0xff]
    %v39 = vld [vmem:[#allocation2 + $0x70] sm:$0xff]
    %vm40 = vcmp.ge.f32.partialorder %v25, 0.7
    %vm41 = vcmp.ge.f32.partialorder %v26, 0.7
    %vm42 = vcmp.ge.f32.partialorder %v27, 0.7
    %vm43 = vcmp.ge.f32.partialorder %v28, 0.7
    %vm44 = vcmp.ge.f32.partialorder %v29, 0.7
    %vm45 = vcmp.ge.f32.partialorder %v30, 0.7
    %vm46 = vcmp.ge.f32.partialorder %v31, 0.7
    %vm47 = vcmp.ge.f32.partialorder %v32, 0.7
    %vm48 = vcmp.ge.f32.partialorder %v33, 0.7
    %vm49 = vcmp.ge.f32.partialorder %v34, 0.7
    %vm50 = vcmp.ge.f32.partialorder %v35, 0.7
    %vm51 = vcmp.ge.f32.partialorder %v36, 0.7
    %vm52 = vcmp.ge.f32.partialorder %v37, 0.7
    %vm53 = vcmp.ge.f32.partialorder %v38, 0.7
    %vm54 = vcmp.ge.f32.partialorder %v39, 0.7
    %v55 = vsel %vm40, %v25, 0.0
    %v56 = vsel %vm41, %v26, 0.0
    %v57 = vsel %vm42, %v27, 0.0
    %v58 = vsel %vm43, %v28, 0.0
    %v59 = vsel %vm44, %v29, 0.0
    %v60 = vsel %vm45, %v30, 0.0
    %v61 = vsel %vm46, %v31, 0.0
    %v62 = vsel %vm47, %v32, 0.0
    %v63 = vsel %vm48, %v33, 0.0
    %v64 = vsel %vm49, %v34, 0.0
    %v65 = vsel %vm50, %v35, 0.0
    %v66 = vsel %vm51, %v36, 0.0
    %v67 = vsel %vm52, %v37, 0.0
    %v68 = vsel %vm53, %v38, 0.0
    %v69 = vsel %vm54, %v39, 0.0
    %70 = vst [vmem:[#allocation5] sm:$0xff] %v55
    %71 = vst [vmem:[#allocation5 + $0x8] sm:$0xff] %v56
    %72 = vst [vmem:[#allocation5 + $0x10] sm:$0xff] %v57
    %73 = vst [vmem:[#allocation5 + $0x18] sm:$0xff] %v58
    %74 = vst [vmem:[#allocation5 + $0x20] sm:$0xff] %v59
    %75 = vst [vmem:[#allocation5 + $0x28] sm:$0xff] %v60
    %76 = vst [vmem:[#allocation5 + $0x30] sm:$0xff] %v61
    %77 = vst [vmem:[#allocation5 + $0x38] sm:$0xff] %v62
    %78 = vst [vmem:[#allocation5 + $0x40] sm:$0xff] %v63
    %79 = vst [vmem:[#allocation5 + $0x48] sm:$0xff] %v64
    %80 = vst [vmem:[#allocation5 + $0x50] sm:$0xff] %v65
    %81 = vst [vmem:[#allocation5 + $0x58] sm:$0xff] %v66
    %82 = vst [vmem:[#allocation5 + $0x60] sm:$0xff] %v67
    %83 = vst [vmem:[#allocation5 + $0x68] sm:$0xff] %v68
    %84 = vst [vmem:[#allocation5 + $0x70] sm:$0xff] %v69
    // Predicated region
    $region10: #{tpu_custom_call.1} parent=1 // pred_check
      _
    $region11: #{tpu_custom_call.1} parent=1 // pred_check_branch
      %86 = sbr.rel (0) target = $region13
    $region12: #{tpu_custom_call.1} parent=1 // pred_region
      %88 = vsyncadd [#allocation4], 0
      %s89 = sshll.u32 [#allocation5], 4
      %s90 = int_to_ptr.vmem [resolvable:$true] %s89
      %s91 = sshll.u32 %s1, 4
      %s92 = int_to_ptr.hbm [resolvable:$true] %s91
      %97 = dma.vmem_to_hbm [thread:$0]  %s90, 1920, %s92, [#allocation4], 128, 128, 8
    $region13: #{tpu_custom_call.1} parent=1 // pred_fallthru
      _
    // Predicated region
    $region14: #{tpu_custom_call.1} parent=1 // pred_check
      _
    $region15: #{tpu_custom_call.1} parent=1 // pred_check_branch
      %99 = sbr.rel (0) target = $region17
    $region16: #{tpu_custom_call.1} parent=1 // pred_region
      %101 = dma.done [#allocation4], 1920
    $region17: #{tpu_custom_call.1} parent=1 // pred_fallthru
      _
    %102 = vsyncpa [#allocation3], 1
    %103 = vsyncpa [#allocation4], 1

</llo_original>
